<compile_context>
chip_gen: v7x
topology: tpu7x:2x2x1
jax: 0.10.0
libtpu: 0.0.40
codegen_flags: <defaults>
</compile_context>

<pallas_src>
import functools

import jax
import jax.numpy as jnp
from jax.experimental import pallas as pl
from jax.experimental.pallas import tpu as pltpu

BN_EPS = 1e-5
LANE = 128          # lane (last-dim) granularity of a vreg
SUBLANE_BF16 = 16   # bf16 packs 16 rows per sublane group -> pad batch to 16


def _round_up(x, m):
    return ((x + m - 1) // m) * m


def _pad2d(a, rows, cols, dtype=None):
    a = jnp.asarray(a)
    out = jnp.pad(a, ((0, rows - a.shape[0]), (0, cols - a.shape[1])))
    return out.astype(dtype) if dtype is not None else out


@functools.lru_cache(maxsize=1)
def _vmem_cap_bytes():
    try:
        return int(pltpu.get_tpu_info().vmem_capacity_bytes)
    except Exception:
        return 64 * 1024 * 1024   # conservative (v7x per-TC) fallback


# ---------------------------------------------------------------------------
# Fused kernel (built per (num_hidden_blocks, batch) configuration)
# ---------------------------------------------------------------------------
def _build_fused_mlp_kernel(num_hidden_blocks, n_rows, n_rows_padded):
    """Kernel refs: x, [W_i, gamma_i, beta_i] * num_hidden_blocks, W_last,
    b_last, out."""
    inv_n = 1.0 / float(n_rows)            # divide by the *real* batch size
    # The mask only exists so the NEXT layer's BN stats ignore padded rows;
    # with a single hidden block (or no padding) it is never needed.
    need_row_mask = (n_rows_padded != n_rows) and num_hidden_blocks > 1

    def kernel(*refs):
        x_ref = refs[0]
        o_ref = refs[-1]
        idx = 1

        act = x_ref[...]                    # bf16 [N_pad, D_pad]

        if need_row_mask:
            rows = jax.lax.broadcasted_iota(jnp.int32, (n_rows_padded, 1), 0)
            row_mask = (rows < n_rows).astype(jnp.float32)

        # Hidden blocks: Linear (bias folded away by BN) -> BatchNorm -> ReLU
        for blk_i in range(num_hidden_blocks):
            w_ref, g_ref, bt_ref = refs[idx], refs[idx + 1], refs[idx + 2]
            idx += 3

            y = jnp.dot(act, w_ref[...], preferred_element_type=jnp.float32)

            # One-pass batch statistics. Padded rows of y are exactly zero
            # (enforced by the row mask / zero-padded x), so the sums only
            # see real rows; divide by the real batch size.
            mean = jnp.sum(y, axis=0, keepdims=True) * inv_n
            ex2 = jnp.sum(y * y, axis=0, keepdims=True) * inv_n
            var = jnp.maximum(ex2 - mean * mean, 0.0)   # clamp cancellation
            scale = g_ref[...] * jax.lax.rsqrt(var + BN_EPS)
            shift = bt_ref[...] - mean * scale

            h = jnp.maximum(y * scale + shift, 0.0)
            # Skip the mask for the LAST hidden block: the final Linear's
            # padded rows feed no statistics and are sliced off outside.
            if need_row_mask and blk_i < num_hidden_blocks - 1:
                h = h * row_mask
            act = h.astype(jnp.bfloat16)

        # Final Linear (with bias)
        w_ref, b_ref = refs[idx], refs[idx + 1]
        y = jnp.dot(act, w_ref[...], preferred_element_type=jnp.float32)
        o_ref[...] = (y + b_ref[...]).astype(o_ref.dtype)

    return kernel


# ---------------------------------------------------------------------------
# One-time parameter preparation: pad + cast to device layout
# ---------------------------------------------------------------------------
def prepare_mlp_params(params):
    """Returns (static_config, operand_arrays) with weights already padded to
    lane multiples and cast to bf16 (gamma/beta/bias stay f32)."""
    num_layers = params["num_layers"]
    if num_layers == 1:
        hidden_blocks = []
        last_w, last_b = params["linear"]
    else:
        hidden_blocks = [params["first"]] + list(params["middle"])
        last_w, last_b = params["last"]

    d_in = hidden_blocks[0]["w"].shape[0] if hidden_blocks else last_w.shape[0]
    d_out = last_w.shape[1]
    d_in_pad = _round_up(d_in, LANE)
    d_out_pad = _round_up(d_out, LANE)

    arrays = []
    hidden_pads = []
    prev_pad = d_in_pad
    for blk in hidden_blocks:
        w, gamma, beta = blk["w"], blk["gamma"], blk["beta"]
        h_pad = _round_up(w.shape[1], LANE)
        # NOTE: the hidden-layer bias blk["b"] is intentionally NOT passed:
        # it is cancelled exactly by the batch-mean subtraction inside BN.
        arrays.append(_pad2d(w, prev_pad, h_pad, jnp.bfloat16))
        arrays.append(_pad2d(gamma, 1, h_pad, jnp.float32))
        arrays.append(_pad2d(beta, 1, h_pad, jnp.float32))
        hidden_pads.append(h_pad)
        prev_pad = h_pad

    arrays.append(_pad2d(last_w, prev_pad, d_out_pad, jnp.bfloat16))
    arrays.append(_pad2d(last_b, 1, d_out_pad, jnp.float32))

    config = (len(hidden_blocks), d_in, d_out, d_in_pad, d_out_pad,
              tuple(hidden_pads))
    return config, tuple(arrays)


# ---------------------------------------------------------------------------
# Forward: jitted (static config), single fused pallas_call
# ---------------------------------------------------------------------------
@functools.partial(jax.jit, static_argnums=(0,))
def _mlp_forward_impl(config, arrays, x):
    num_hidden, d_in, d_out, d_in_pad, d_out_pad, hidden_pads = config
    n = x.shape[0]
    n_pad = _round_up(n, SUBLANE_BF16)

    x_p = _pad2d(x, n_pad, d_in_pad, jnp.bfloat16)
    operands = [x_p] + list(arrays)

    # Cost model + VMEM budget (all weights + activations stay resident).
    out_widths = list(hidden_pads) + [d_out_pad]
    in_widths = [d_in_pad] + list(hidden_pads)
    flops = sum(2 * n_pad * k * m for k, m in zip(in_widths, out_widths))
    transcendentals = sum(hidden_pads)
    out_bytes = n_pad * d_out_pad * 4
    bytes_accessed = sum(int(op.size) * op.dtype.itemsize
                         for op in operands) + out_bytes
    max_width = max([d_in_pad] + out_widths)
    act_bytes = n_pad * max_width * 4
    needed = bytes_accessed + 6 * act_bytes
    cap = _vmem_cap_bytes()
    vmem_limit = int(min(max(2 * needed, 8 * 1024 * 1024), int(0.75 * cap)))

    kernel = _build_fused_mlp_kernel(num_hidden, n, n_pad)

    out_padded = pl.pallas_call(
        kernel,
        out_shape=jax.ShapeDtypeStruct((n_pad, d_out_pad), jnp.float32),
        in_specs=[pl.BlockSpec(op.shape, lambda: (0, 0)) for op in operands],
        out_specs=pl.BlockSpec((n_pad, d_out_pad), lambda: (0, 0)),
        compiler_params=pltpu.CompilerParams(vmem_limit_bytes=vmem_limit),
        cost_estimate=pl.CostEstimate(
            flops=flops,
            transcendentals=transcendentals,
            bytes_accessed=bytes_accessed,
        ),
    )(*operands)

    return out_padded[:n, :d_out]


def mlp_forward(prepared, x):
    config, arrays = prepared
    return _mlp_forward_impl(config, arrays, x)


# ---------------------------------------------------------------------------
# Parameter construction (mirrors nn.Linear / nn.BatchNorm1d defaults)
# ---------------------------------------------------------------------------
def init_mlp_params(key, num_layers, input_dim, hidden_dim, output_dim):
    params = {"num_layers": num_layers}

    def linear_params(k, d_in, d_out):
        kw, kb = jax.random.split(k)
        bound = 1.0 / float(d_in) ** 0.5
        w = jax.random.uniform(kw, (d_in, d_out), jnp.float32, -bound, bound)
        b = jax.random.uniform(kb, (1, d_out), jnp.float32, -bound, bound)
        return w, b

    if num_layers == 1:
        params["linear"] = linear_params(key, input_dim, output_dim)
        return params

    keys = jax.random.split(key, num_layers)

    def bn_block(k, d_in, d_out):
        w, b = linear_params(k, d_in, d_out)
        return {
            "w": w,
            "b": b,   # kept for the reference; folded away in the kernel
            "gamma": jnp.ones((1, d_out), jnp.float32),
            "beta": jnp.zeros((1, d_out), jnp.float32),
        }

    params["first"] = bn_block(keys[0], input_dim, hidden_dim)
    params["middle"] = [bn_block(keys[1 + i], hidden_dim, hidden_dim)
                        for i in range(num_layers - 2)]
    params["last"] = linear_params(keys[-1], hidden_dim, output_dim)
    return params


# ---------------------------------------------------------------------------
# Plain-JAX reference (PyTorch structure: bias + two-pass BN), matmuls in bf16
# to mirror the kernel's MXU precision.
# ---------------------------------------------------------------------------
def mlp_forward_ref(params, x):
    def mm(a, w):
        return jnp.dot(a.astype(jnp.bfloat16), w.astype(jnp.bfloat16),
                       preferred_element_type=jnp.float32)

    if params["num_layers"] == 1:
        w, b = params["linear"]
        return mm(x, w) + b

    def block(h, blk):
        y = mm(h, blk["w"]) + blk["b"]
        mean = y.mean(axis=0, keepdims=True)
        var = ((y - mean) ** 2).mean(axis=0, keepdims=True)
        y = blk["gamma"] * (y - mean) / jnp.sqrt(var + BN_EPS) + blk["beta"]
        return jnp.maximum(y, 0.0)

    h = block(x, params["first"])
    for blk in params["middle"]:
        h = block(h, blk)
    w, b = params["last"]
    return mm(h, w) + b


# ---------------------------------------------------------------------------
if __name__ == "__main__":
    key = jax.random.PRNGKey(0)

    configs = [
        # (num_layers, input_dim, hidden_dim, output_dim, batch)
        (3, 16, 32, 8, 8),   # first + one middle + last; batch padded 8->16
        (2, 16, 32, 8, 5),   # single hidden block, odd batch
        (1, 16, 32, 8, 8),   # single-Linear path
        (4, 16, 32, 8, 12),  # two middle layers; exercises the row mask
    ]

    for cfg in configs:
        num_layers, input_dim, hidden_dim, output_dim, batch = cfg
        k_param, k_x, key = jax.random.split(key, 3)
        params = init_mlp_params(k_param, num_layers, input_dim, hidden_dim,
                                 output_dim)
        prepared = prepare_mlp_params(params)
        x = jax.random.normal(k_x, (batch, input_dim), jnp.float32)

        out = jax.block_until_ready(mlp_forward(prepared, x))
        ref = mlp_forward_ref(params, x)

        assert out.shape == (batch, output_dim), f"bad shape for {cfg}"
        assert jnp.allclose(out, ref, atol=1e-2, rtol=1e-2), \
            f"mismatch vs reference for {cfg}"

    print("KERNEL_OK")
</pallas_src>

<mosaic_0001>
module attributes {stable_mosaic.version = 11 : i64} {
  func.func @kernel(%arg0: memref<16x128xbf16, #tpu.memory_space<vmem>>, %arg1: memref<128x128xbf16, #tpu.memory_space<vmem>>, %arg2: memref<1x128xf32, #tpu.memory_space<vmem>>, %arg3: memref<1x128xf32, #tpu.memory_space<vmem>>, %arg4: memref<128x128xbf16, #tpu.memory_space<vmem>>, %arg5: memref<1x128xf32, #tpu.memory_space<vmem>>, %arg6: memref<1x128xf32, #tpu.memory_space<vmem>>, %arg7: memref<128x128xbf16, #tpu.memory_space<vmem>>, %arg8: memref<1x128xf32, #tpu.memory_space<vmem>>, %arg9: memref<16x128xf32, #tpu.memory_space<vmem>>) attributes {dimension_semantics = [], scalar_prefetch = 0 : i64, scratch_operands = 0 : i64, tpu.core_type = #tpu.core_type<tc>} {
    %c0 = arith.constant 0 : index
    %c0_0 = arith.constant 0 : index
    %0 = vector.load %arg0[%c0, %c0_0] : memref<16x128xbf16, #tpu.memory_space<vmem>>, vector<16x128xbf16>
    %1 = tpu.iota {dimensions = array<i32: 0>} : vector<16x1xi32>
    %c8_i32 = arith.constant 8 : i32
    %2 = vector.broadcast %c8_i32 : i32 to vector<16x1xi32>
    %3 = arith.cmpi slt, %1, %2 : vector<16x1xi32>
    %4 = arith.extui %3 : vector<16x1xi1> to vector<16x1xi32>
    %5 = arith.sitofp %4 : vector<16x1xi32> to vector<16x1xf32>
    %c0_1 = arith.constant 0 : index
    %c0_2 = arith.constant 0 : index
    %6 = vector.load %arg1[%c0_1, %c0_2] : memref<128x128xbf16, #tpu.memory_space<vmem>>, vector<128x128xbf16>
    %cst = arith.constant dense<0.000000e+00> : vector<16x128xf32>
    %7 = tpu.matmul %0, %6, %cst {dimension_numbers = #tpu.dot_dimension_numbers<[1], [0], [0], [1], [0, 0, 1, 1], [], []>} : vector<16x128xbf16>, vector<128x128xbf16>, vector<16x128xf32> -> vector<16x128xf32>
    %cst_3 = arith.constant dense<0.000000e+00> : vector<128xf32>
    %8 = vector.multi_reduction <add>, %7, %cst_3 [0] : vector<16x128xf32> to vector<128xf32>
    %9 = vector.shape_cast %8 : vector<128xf32> to vector<1x128xf32>
    %cst_4 = arith.constant 1.250000e-01 : f32
    %10 = vector.broadcast %cst_4 : f32 to vector<1x128xf32>
    %11 = arith.mulf %9, %10 : vector<1x128xf32>
    %12 = arith.mulf %7, %7 : vector<16x128xf32>
    %cst_5 = arith.constant dense<0.000000e+00> : vector<128xf32>
    %13 = vector.multi_reduction <add>, %12, %cst_5 [0] : vector<16x128xf32> to vector<128xf32>
    %14 = vector.shape_cast %13 : vector<128xf32> to vector<1x128xf32>
    %cst_6 = arith.constant 1.250000e-01 : f32
    %15 = vector.broadcast %cst_6 : f32 to vector<1x128xf32>
    %16 = arith.mulf %14, %15 : vector<1x128xf32>
    %17 = arith.mulf %11, %11 : vector<1x128xf32>
    %18 = arith.subf %16, %17 : vector<1x128xf32>
    %cst_7 = arith.constant 0.000000e+00 : f32
    %19 = vector.broadcast %cst_7 : f32 to vector<1x128xf32>
    %20 = arith.maximumf %18, %19 : vector<1x128xf32>
    %c0_8 = arith.constant 0 : index
    %c0_9 = arith.constant 0 : index
    %21 = vector.load %arg2[%c0_8, %c0_9] : memref<1x128xf32, #tpu.memory_space<vmem>>, vector<1x128xf32>
    %cst_10 = arith.constant 9.99999974E-6 : f32
    %22 = vector.broadcast %cst_10 : f32 to vector<1x128xf32>
    %23 = arith.addf %20, %22 : vector<1x128xf32>
    %24 = math.rsqrt %23 : vector<1x128xf32>
    %25 = arith.mulf %21, %24 : vector<1x128xf32>
    %c0_11 = arith.constant 0 : index
    %c0_12 = arith.constant 0 : index
    %26 = vector.load %arg3[%c0_11, %c0_12] : memref<1x128xf32, #tpu.memory_space<vmem>>, vector<1x128xf32>
    %27 = arith.mulf %11, %25 : vector<1x128xf32>
    %28 = arith.subf %26, %27 : vector<1x128xf32>
    %29 = vector.broadcast %25 : vector<1x128xf32> to vector<16x128xf32>
    %30 = arith.mulf %7, %29 : vector<16x128xf32>
    %31 = vector.broadcast %28 : vector<1x128xf32> to vector<16x128xf32>
    %32 = arith.addf %30, %31 : vector<16x128xf32>
    %cst_13 = arith.constant 0.000000e+00 : f32
    %33 = vector.broadcast %cst_13 : f32 to vector<16x128xf32>
    %34 = arith.maximumf %32, %33 : vector<16x128xf32>
    %35 = vector.broadcast %5 : vector<16x1xf32> to vector<16x128xf32>
    %36 = arith.mulf %34, %35 : vector<16x128xf32>
    %37 = arith.truncf %36 : vector<16x128xf32> to vector<16x128xbf16>
    %c0_14 = arith.constant 0 : index
    %c0_15 = arith.constant 0 : index
    %38 = vector.load %arg4[%c0_14, %c0_15] : memref<128x128xbf16, #tpu.memory_space<vmem>>, vector<128x128xbf16>
    %cst_16 = arith.constant dense<0.000000e+00> : vector<16x128xf32>
    %39 = tpu.matmul %37, %38, %cst_16 {dimension_numbers = #tpu.dot_dimension_numbers<[1], [0], [0], [1], [0, 0, 1, 1], [], []>} : vector<16x128xbf16>, vector<128x128xbf16>, vector<16x128xf32> -> vector<16x128xf32>
    %cst_17 = arith.constant dense<0.000000e+00> : vector<128xf32>
    %40 = vector.multi_reduction <add>, %39, %cst_17 [0] : vector<16x128xf32> to vector<128xf32>
    %41 = vector.shape_cast %40 : vector<128xf32> to vector<1x128xf32>
    %cst_18 = arith.constant 1.250000e-01 : f32
    %42 = vector.broadcast %cst_18 : f32 to vector<1x128xf32>
    %43 = arith.mulf %41, %42 : vector<1x128xf32>
    %44 = arith.mulf %39, %39 : vector<16x128xf32>
    %cst_19 = arith.constant dense<0.000000e+00> : vector<128xf32>
    %45 = vector.multi_reduction <add>, %44, %cst_19 [0] : vector<16x128xf32> to vector<128xf32>
    %46 = vector.shape_cast %45 : vector<128xf32> to vector<1x128xf32>
    %cst_20 = arith.constant 1.250000e-01 : f32
    %47 = vector.broadcast %cst_20 : f32 to vector<1x128xf32>
    %48 = arith.mulf %46, %47 : vector<1x128xf32>
    %49 = arith.mulf %43, %43 : vector<1x128xf32>
    %50 = arith.subf %48, %49 : vector<1x128xf32>
    %cst_21 = arith.constant 0.000000e+00 : f32
    %51 = vector.broadcast %cst_21 : f32 to vector<1x128xf32>
    %52 = arith.maximumf %50, %51 : vector<1x128xf32>
    %c0_22 = arith.constant 0 : index
    %c0_23 = arith.constant 0 : index
    %53 = vector.load %arg5[%c0_22, %c0_23] : memref<1x128xf32, #tpu.memory_space<vmem>>, vector<1x128xf32>
    %cst_24 = arith.constant 9.99999974E-6 : f32
    %54 = vector.broadcast %cst_24 : f32 to vector<1x128xf32>
    %55 = arith.addf %52, %54 : vector<1x128xf32>
    %56 = math.rsqrt %55 : vector<1x128xf32>
    %57 = arith.mulf %53, %56 : vector<1x128xf32>
    %c0_25 = arith.constant 0 : index
    %c0_26 = arith.constant 0 : index
    %58 = vector.load %arg6[%c0_25, %c0_26] : memref<1x128xf32, #tpu.memory_space<vmem>>, vector<1x128xf32>
    %59 = arith.mulf %43, %57 : vector<1x128xf32>
    %60 = arith.subf %58, %59 : vector<1x128xf32>
    %61 = vector.broadcast %57 : vector<1x128xf32> to vector<16x128xf32>
    %62 = arith.mulf %39, %61 : vector<16x128xf32>
    %63 = vector.broadcast %60 : vector<1x128xf32> to vector<16x128xf32>
    %64 = arith.addf %62, %63 : vector<16x128xf32>
    %cst_27 = arith.constant 0.000000e+00 : f32
    %65 = vector.broadcast %cst_27 : f32 to vector<16x128xf32>
    %66 = arith.maximumf %64, %65 : vector<16x128xf32>
    %67 = arith.truncf %66 : vector<16x128xf32> to vector<16x128xbf16>
    %c0_28 = arith.constant 0 : index
    %c0_29 = arith.constant 0 : index
    %68 = vector.load %arg7[%c0_28, %c0_29] : memref<128x128xbf16, #tpu.memory_space<vmem>>, vector<128x128xbf16>
    %cst_30 = arith.constant dense<0.000000e+00> : vector<16x128xf32>
    %69 = tpu.matmul %67, %68, %cst_30 {dimension_numbers = #tpu.dot_dimension_numbers<[1], [0], [0], [1], [0, 0, 1, 1], [], []>} : vector<16x128xbf16>, vector<128x128xbf16>, vector<16x128xf32> -> vector<16x128xf32>
    %c0_31 = arith.constant 0 : index
    %c0_32 = arith.constant 0 : index
    %70 = vector.load %arg8[%c0_31, %c0_32] : memref<1x128xf32, #tpu.memory_space<vmem>>, vector<1x128xf32>
    %71 = vector.broadcast %70 : vector<1x128xf32> to vector<16x128xf32>
    %72 = arith.addf %69, %71 : vector<16x128xf32>
    %c0_33 = arith.constant 0 : index
    %c0_34 = arith.constant 0 : index
    %73 = vector.load %arg9[%c0_33, %c0_34] : memref<16x128xf32, #tpu.memory_space<vmem>>, vector<16x128xf32>
    tpu.vector_store %arg9[%c0_33, %c0_34], %72 {strides = array<i32>} : memref<16x128xf32, #tpu.memory_space<vmem>>, vector<16x128xf32>,
    return
  }
}

</mosaic_0001>

<llo_original>
// kernel: _mlp_forward_impl.1
$region0: #{_mlp_forward_impl.1}
  #allocation0 [shape = 'u32[]', space=smem, size = 0x4, offset = 0x4, fixed_abs, tag = 'smem constant byte address 0x4 - core index']
  #allocation1 [shape = 'u32[144,128]{1,0:T(1,128)}', space=vmem, size = 0x12000, scoped, tag = 'internal scratch']
  %s0 = inlined_call_operand.vmem [shape: bf16[16,128], index: 0, kind: input, shape index: {}]
  %s1 = inlined_call_operand.hbm [shape: bf16[128,128], index: 1, kind: input, shape index: {}]
  %s2 = inlined_call_operand.vmem [shape: f32[1,128], index: 2, kind: input, shape index: {}]
  %s3 = inlined_call_operand.vmem [shape: f32[1,128], index: 3, kind: input, shape index: {}]
  %s4 = inlined_call_operand.hbm [shape: bf16[128,128], index: 4, kind: input, shape index: {}]
  %s5 = inlined_call_operand.vmem [shape: f32[1,128], index: 5, kind: input, shape index: {}]
  %s6 = inlined_call_operand.vmem [shape: f32[1,128], index: 6, kind: input, shape index: {}]
  %s7 = inlined_call_operand.hbm [shape: bf16[128,128], index: 7, kind: input, shape index: {}]
  %s8 = inlined_call_operand.vmem [shape: f32[1,128], index: 8, kind: input, shape index: {}]
  %s9 = inlined_call_operand.vmem [shape: f32[16,128], index: 9, kind: output, shape index: {}]
  %s10 = sld [smem:[#allocation0]]
  $region58: #{_mlp_forward_impl.1} parent=0
    _
  %s12 = ssub.s32 1, %s10
  %s13 = scalar_select 0, %s12, %s10
  $region1: #{_mlp_forward_impl.1} parent=0
    #allocation2 [shape = 'u8[32768]{0}', space=vmem, size = 0x8000, scoped, tag = 'input window, operand 1, single buffered']
    #allocation3 [shape = 's32[1]{0}', space=sflag, size = 0x4, scoped, tag = 'scoped memory for _mlp_forward_impl.1']
    #allocation4 [shape = 'u8[32768]{0}', space=vmem, size = 0x8000, scoped, tag = 'input window, operand 4, single buffered']
    #allocation5 [shape = 's32[1]{0}', space=sflag, size = 0x4, scoped, tag = 'scoped memory for _mlp_forward_impl.1']
    #allocation6 [shape = 'u8[32768]{0}', space=vmem, size = 0x8000, scoped, tag = 'input window, operand 7, single buffered']
    %14 = vsyncpa [#allocation3], 0
    %15 = vsyncpa [#allocation5], 0
    // Predicated region
    $region2: #{_mlp_forward_impl.1} parent=1 // pred_check
      _
    $region3: #{_mlp_forward_impl.1} parent=1 // pred_check_branch
      %17 = sbr.rel (0) target = $region5
    $region4: #{_mlp_forward_impl.1} parent=1 // pred_region
      _
    $region5: #{_mlp_forward_impl.1} parent=1 // pred_fallthru
      _
    // Predicated region
    $region6: #{_mlp_forward_impl.1} parent=1 // pred_check
      _
    $region7: #{_mlp_forward_impl.1} parent=1 // pred_check_branch
      %19 = sbr.rel (0) target = $region9
    $region8: #{_mlp_forward_impl.1} parent=1 // pred_region
      %s21 = ssub.s32 1024, 1024
      %22 = vsyncadd [#allocation3], %s21
      %s23 = sshll.u32 [#allocation2], 4
      %s24 = int_to_ptr.vmem [resolvable:$true] %s23
      %29 = dma.hbm_to_vmem [thread:$0]  %s1, 1024, %s24, [#allocation3], 64, 64, 4
    $region9: #{_mlp_forward_impl.1} parent=1 // pred_fallthru
      _
    // Predicated region
    $region10: #{_mlp_forward_impl.1} parent=1 // pred_check
      _
    $region11: #{_mlp_forward_impl.1} parent=1 // pred_check_branch
      %31 = sbr.rel (0) target = $region13
    $region12: #{_mlp_forward_impl.1} parent=1 // pred_region
      _
    $region13: #{_mlp_forward_impl.1} parent=1 // pred_fallthru
      _
    // Predicated region
    $region14: #{_mlp_forward_impl.1} parent=1 // pred_check
      _
    $region15: #{_mlp_forward_impl.1} parent=1 // pred_check_branch
      %33 = sbr.rel (0) target = $region17
    $region16: #{_mlp_forward_impl.1} parent=1 // pred_region
      _
    $region17: #{_mlp_forward_impl.1} parent=1 // pred_fallthru
      _
    // Predicated region
    $region18: #{_mlp_forward_impl.1} parent=1 // pred_check
      _
    $region19: #{_mlp_forward_impl.1} parent=1 // pred_check_branch
      %35 = sbr.rel (0) target = $region21
    $region20: #{_mlp_forward_impl.1} parent=1 // pred_region
      %s37 = ssub.s32 1024, 1024
      %38 = vsyncadd [#allocation5], %s37
      %s39 = sshll.u32 [#allocation4], 4
      %s40 = int_to_ptr.vmem [resolvable:$true] %s39
      %45 = dma.hbm_to_vmem [thread:$0]  %s4, 1024, %s40, [#allocation5], 64, 64, 4
    $region21: #{_mlp_forward_impl.1} parent=1 // pred_fallthru
      _
    // Predicated region
    $region22: #{_mlp_forward_impl.1} parent=1 // pred_check
      _
    $region23: #{_mlp_forward_impl.1} parent=1 // pred_check_branch
      %47 = sbr.rel (0) target = $region25
    $region24: #{_mlp_forward_impl.1} parent=1 // pred_region
      _
    $region25: #{_mlp_forward_impl.1} parent=1 // pred_fallthru
      _
    // Predicated region
    $region26: #{_mlp_forward_impl.1} parent=1 // pred_check
      _
    $region27: #{_mlp_forward_impl.1} parent=1 // pred_check_branch
      %49 = sbr.rel (0) target = $region29
    $region28: #{_mlp_forward_impl.1} parent=1 // pred_region
      _
    $region29: #{_mlp_forward_impl.1} parent=1 // pred_fallthru
      _
    // Predicated region
    $region30: #{_mlp_forward_impl.1} parent=1 // pred_check
      _
    $region31: #{_mlp_forward_impl.1} parent=1 // pred_check_branch
      %51 = sbr.rel (0) target = $region33
    $region32: #{_mlp_forward_impl.1} parent=1 // pred_region
      %s53 = ssub.s32 1024, 1024
      %54 = vsyncadd [#allocation5], %s53
      %s55 = sshll.u32 [#allocation6], 4
      %s56 = int_to_ptr.vmem [resolvable:$true] %s55
      %61 = dma.hbm_to_vmem [thread:$0]  %s7, 1024, %s56, [#allocation5], 64, 64, 4
    $region33: #{_mlp_forward_impl.1} parent=1 // pred_fallthru
      _
    // Predicated region
    $region34: #{_mlp_forward_impl.1} parent=1 // pred_check
      _
    $region35: #{_mlp_forward_impl.1} parent=1 // pred_check_branch
      %63 = sbr.rel (0) target = $region37
    $region36: #{_mlp_forward_impl.1} parent=1 // pred_region
      _
    $region37: #{_mlp_forward_impl.1} parent=1 // pred_fallthru
      _
    // Predicated region
    $region38: #{_mlp_forward_impl.1} parent=1 // pred_check
      _
    $region39: #{_mlp_forward_impl.1} parent=1 // pred_check_branch
      %65 = sbr.rel (0) target = $region41
    $region40: #{_mlp_forward_impl.1} parent=1 // pred_region
      %66 = dma.done [#allocation3], 1024
    $region41: #{_mlp_forward_impl.1} parent=1 // pred_fallthru
      _
    // Predicated region
    $region42: #{_mlp_forward_impl.1} parent=1 // pred_check
      _
    $region43: #{_mlp_forward_impl.1} parent=1 // pred_check_branch
      %68 = sbr.rel (0) target = $region45
    $region44: #{_mlp_forward_impl.1} parent=1 // pred_region
      %69 = dma.done [#allocation5], 1024
    $region45: #{_mlp_forward_impl.1} parent=1 // pred_fallthru
      _
    // Predicated region
    $region46: #{_mlp_forward_impl.1} parent=1 // pred_check
      _
    $region47: #{_mlp_forward_impl.1} parent=1 // pred_check_branch
      %71 = sbr.rel (0) target = $region49
    $region48: #{_mlp_forward_impl.1} parent=1 // pred_region
      %72 = dma.done [#allocation5], 1024
    $region49: #{_mlp_forward_impl.1} parent=1 // pred_fallthru
      _
    %v74 = vld [vmem:[%s0] sm:$0xf]
    %v75 = vld [vmem:[%s0 + $0x4] sm:$0xf]
    %v76 = vlaneseq
    %v77 = vshrl.u32 %v76, 7
    %v78 = vadd.s32 %v77, 8
    %vm79 = vcmp.lt.s32.totalorder %v77, 8
    %vm80 = vcmp.lt.s32.totalorder %v78, 8
    %v81 = vsel %vm79, 1, 0
    %v82 = vsel %vm80, 1, 0
    %v83 = vcvt.s32.f32 %v81
    %v84 = vcvt.s32.f32 %v82
    %v85 = vld [vmem:[#allocation2] sm:$0xf]
    %v86 = vld [vmem:[#allocation2 + $0x4] sm:$0xf]
    %v87 = vld [vmem:[#allocation2 + $0x8] sm:$0xf]
    %v88 = vld [vmem:[#allocation2 + $0xc] sm:$0xf]
    %v89 = vld [vmem:[#allocation2 + $0x10] sm:$0xf]
    %v90 = vld [vmem:[#allocation2 + $0x14] sm:$0xf]
    %v91 = vld [vmem:[#allocation2 + $0x18] sm:$0xf]
    %v92 = vld [vmem:[#allocation2 + $0x1c] sm:$0xf]
    %v93 = vld [vmem:[#allocation2 + $0x20] sm:$0xf]
    %v94 = vld [vmem:[#allocation2 + $0x24] sm:$0xf]
    %v95 = vld [vmem:[#allocation2 + $0x28] sm:$0xf]
    %v96 = vld [vmem:[#allocation2 + $0x2c] sm:$0xf]
    %v97 = vld [vmem:[#allocation2 + $0x30] sm:$0xf]
    %v98 = vld [vmem:[#allocation2 + $0x34] sm:$0xf]
    %v99 = vld [vmem:[#allocation2 + $0x38] sm:$0xf]
    %v100 = vld [vmem:[#allocation2 + $0x3c] sm:$0xf]
    %v103 = vunpack.c.l.b16 %v74
    %v104 = vunpack.c.l.b16 %v75
    %v105 = vpack.c.b16 %v104, %v103
    %v123 = vunpack.c.l.b16 %v85
    %v124 = vunpack.c.l.b16 %v86
    %v125 = vunpack.c.l.b16 %v87
    %v126 = vunpack.c.l.b16 %v88
    %v127 = vunpack.c.l.b16 %v89
    %v128 = vunpack.c.l.b16 %v90
    %v129 = vunpack.c.l.b16 %v91
    %v130 = vunpack.c.l.b16 %v92
    %v131 = vunpack.c.l.b16 %v93
    %v132 = vunpack.c.l.b16 %v94
    %v133 = vunpack.c.l.b16 %v95
    %v134 = vunpack.c.l.b16 %v96
    %v135 = vunpack.c.l.b16 %v97
    %v136 = vunpack.c.l.b16 %v98
    %v137 = vunpack.c.l.b16 %v99
    %v138 = vunpack.c.l.b16 %v100
    %v139 = vpack.c.b16 %v124, %v123
    %v140 = vpack.c.b16 %v126, %v125
    %v141 = vpack.c.b16 %v128, %v127
    %v142 = vpack.c.b16 %v130, %v129
    %v143 = vpack.c.b16 %v132, %v131
    %v144 = vpack.c.b16 %v134, %v133
    %v145 = vpack.c.b16 %v136, %v135
    %v146 = vpack.c.b16 %v138, %v137
    %155 = vmatprep.subr.bf16.mxu0 0
    %156 = vmatpush1.bf16.msra.mxu0 %v139
    %157 = vmatprep.subr.bf16.mxu0 0
    %158 = vmatpush1.bf16.msra.mxu0 %v140
    %159 = vmatprep.subr.bf16.mxu0 0
    %160 = vmatpush1.bf16.msra.mxu0 %v141
    %161 = vmatprep.subr.bf16.mxu0 0
    %162 = vmatpush1.bf16.msra.mxu0 %v142
    %163 = vmatprep.subr.bf16.mxu0 0
    %164 = vmatpush1.bf16.msra.mxu0 %v143
    %165 = vmatprep.subr.bf16.mxu0 0
    %166 = vmatpush1.bf16.msra.mxu0 %v144
    %167 = vmatprep.subr.bf16.mxu0 0
    %168 = vmatpush1.bf16.msra.mxu0 %v145
    %169 = vmatprep.subr.bf16.mxu0 0
    %170 = vmatpush1.bf16.msra.mxu0 %v146
    %171 = vmatprep.subr.bf16.mxu0 0
    %172 = vmatpush1.bf16.msra.mxu0 0
    %173 = vmatprep.subr.bf16.mxu0 0
    %174 = vmatpush1.bf16.msra.mxu0 0
    %175 = vmatprep.subr.bf16.mxu0 0
    %176 = vmatpush1.bf16.msra.mxu0 0
    %177 = vmatprep.subr.bf16.mxu0 0
    %178 = vmatpush1.bf16.msra.mxu0 0
    %179 = vmatprep.subr.bf16.mxu0 0
    %180 = vmatpush1.bf16.msra.mxu0 0
    %181 = vmatprep.subr.bf16.mxu0 0
    %182 = vmatpush1.bf16.msra.mxu0 0
    %183 = vmatprep.subr.bf16.mxu0 0
    %184 = vmatpush1.bf16.msra.mxu0 0
    %185 = vmatprep.subr.bf16.mxu0 0
    %186 = vmatpush1.bf16.msra.mxu0 0
    %187 = vmatprep.mubr.bf16.mxu0 0
    %188 = vmatmul.mubr.bf16.gmra.mrb[0].mxu0 %v105
    %v189 = vpop.f32.mrb[0].mxu0
    %v190 = vadd.f32 0.0, %v189
    %v191 = vpop.f32.mrb[0].mxu0
    %v192 = vpop.f32.mrb[0].mxu0
    %v193 = vadd.f32 0.0, %v192
    %v194 = vpop.f32.mrb[0].mxu0
    %195 = vdwg.mxu0
    %v196 = vadd.f32 %v190, %v193
    %v197 = vrot.slane %v196, 4
    %v198 = vadd.f32 %v196, %v197
    %v199 = vrot.slane %v198, 2
    %v200 = vadd.f32 %v198, %v199
    %v201 = vrot.slane %v200, 1
    %v202 = vadd.f32 %v200, %v201
    %v203 = vmul.f32 %v202, 0.125
    %v204 = vmul.f32 %v190, %v190
    %v205 = vmul.f32 %v193, %v193
    %v206 = vadd.f32 %v204, %v205
    %v207 = vrot.slane %v206, 4
    %v208 = vadd.f32 %v206, %v207
    %v209 = vrot.slane %v208, 2
    %v210 = vadd.f32 %v208, %v209
    %v211 = vrot.slane %v210, 1
    %v212 = vadd.f32 %v210, %v211
    %v213 = vmul.f32 %v212, 0.125
    %v214 = vmul.f32 %v203, %v203
    %v215 = vsub.f32 %v213, %v214
    %v216 = vmax.f32 %v215, 0.0
    %v217 = vld [vmem:[%s2] sm:$0x1]
    %v218 = vadd.f32 %v216, 1e-05
    %v219 = vrsqrt.pop %v218
    %v220 = vmul.f32 %v217, %v219
    %v221 = vld [vmem:[%s3] sm:$0x1]
    %v222 = vmul.f32 %v203, %v220
    %v223 = vsub.f32 %v221, %v222
    %v225 = vlaneseq
    %v226 = vshrl.u32 %v225, 7
    %v227 = vsub.s32 0, %v226
    %v228 = vrot.slane %v220, %v227
    %v230 = vmul.f32 %v190, %v228
    %v231 = vmul.f32 %v193, %v228
    %v233 = vlaneseq
    %v234 = vshrl.u32 %v233, 7
    %v235 = vsub.s32 0, %v234
    %v236 = vrot.slane %v223, %v235
    %v238 = vadd.f32 %v230, %v236
    %v239 = vadd.f32 %v231, %v236
    %v240 = vmax.f32 %v238, 0.0
    %v241 = vmax.f32 %v239, 0.0
    %v242 = vmul.f32 %v240, %v83
    %v243 = vmul.f32 %v241, %v84
    %v244 = vpack.c.bf16 %v243, %v242
    %v245 = vld [vmem:[#allocation4] sm:$0xf]
    %v246 = vld [vmem:[#allocation4 + $0x4] sm:$0xf]
    %v247 = vld [vmem:[#allocation4 + $0x8] sm:$0xf]
    %v248 = vld [vmem:[#allocation4 + $0xc] sm:$0xf]
    %v249 = vld [vmem:[#allocation4 + $0x10] sm:$0xf]
    %v250 = vld [vmem:[#allocation4 + $0x14] sm:$0xf]
    %v251 = vld [vmem:[#allocation4 + $0x18] sm:$0xf]
    %v252 = vld [vmem:[#allocation4 + $0x1c] sm:$0xf]
    %v253 = vld [vmem:[#allocation4 + $0x20] sm:$0xf]
    %v254 = vld [vmem:[#allocation4 + $0x24] sm:$0xf]
    %v255 = vld [vmem:[#allocation4 + $0x28] sm:$0xf]
    %v256 = vld [vmem:[#allocation4 + $0x2c] sm:$0xf]
    %v257 = vld [vmem:[#allocation4 + $0x30] sm:$0xf]
    %v258 = vld [vmem:[#allocation4 + $0x34] sm:$0xf]
    %v259 = vld [vmem:[#allocation4 + $0x38] sm:$0xf]
    %v260 = vld [vmem:[#allocation4 + $0x3c] sm:$0xf]
    %v277 = vunpack.c.l.b16 %v245
    %v278 = vunpack.c.l.b16 %v246
    %v279 = vunpack.c.l.b16 %v247
    %v280 = vunpack.c.l.b16 %v248
    %v281 = vunpack.c.l.b16 %v249
    %v282 = vunpack.c.l.b16 %v250
    %v283 = vunpack.c.l.b16 %v251
    %v284 = vunpack.c.l.b16 %v252
    %v285 = vunpack.c.l.b16 %v253
    %v286 = vunpack.c.l.b16 %v254
    %v287 = vunpack.c.l.b16 %v255
    %v288 = vunpack.c.l.b16 %v256
    %v289 = vunpack.c.l.b16 %v257
    %v290 = vunpack.c.l.b16 %v258
    %v291 = vunpack.c.l.b16 %v259
    %v292 = vunpack.c.l.b16 %v260
    %v293 = vpack.c.b16 %v278, %v277
    %v294 = vpack.c.b16 %v280, %v279
    %v295 = vpack.c.b16 %v282, %v281
    %v296 = vpack.c.b16 %v284, %v283
    %v297 = vpack.c.b16 %v286, %v285
    %v298 = vpack.c.b16 %v288, %v287
    %v299 = vpack.c.b16 %v290, %v289
    %v300 = vpack.c.b16 %v292, %v291
    %309 = vmatprep.subr.bf16.mxu0 0
    %310 = vmatpush1.bf16.msra.mxu0 %v293
    %311 = vmatprep.subr.bf16.mxu0 0
    %312 = vmatpush1.bf16.msra.mxu0 %v294
    %313 = vmatprep.subr.bf16.mxu0 0
    %314 = vmatpush1.bf16.msra.mxu0 %v295
    %315 = vmatprep.subr.bf16.mxu0 0
    %316 = vmatpush1.bf16.msra.mxu0 %v296
    %317 = vmatprep.subr.bf16.mxu0 0
    %318 = vmatpush1.bf16.msra.mxu0 %v297
    %319 = vmatprep.subr.bf16.mxu0 0
    %320 = vmatpush1.bf16.msra.mxu0 %v298
    %321 = vmatprep.subr.bf16.mxu0 0
    %322 = vmatpush1.bf16.msra.mxu0 %v299
    %323 = vmatprep.subr.bf16.mxu0 0
    %324 = vmatpush1.bf16.msra.mxu0 %v300
    %325 = vmatprep.subr.bf16.mxu0 0
    %326 = vmatpush1.bf16.msra.mxu0 0
    %327 = vmatprep.subr.bf16.mxu0 0
    %328 = vmatpush1.bf16.msra.mxu0 0
    %329 = vmatprep.subr.bf16.mxu0 0
    %330 = vmatpush1.bf16.msra.mxu0 0
    %331 = vmatprep.subr.bf16.mxu0 0
    %332 = vmatpush1.bf16.msra.mxu0 0
    %333 = vmatprep.subr.bf16.mxu0 0
    %334 = vmatpush1.bf16.msra.mxu0 0
    %335 = vmatprep.subr.bf16.mxu0 0
    %336 = vmatpush1.bf16.msra.mxu0 0
    %337 = vmatprep.subr.bf16.mxu0 0
    %338 = vmatpush1.bf16.msra.mxu0 0
    %339 = vmatprep.subr.bf16.mxu0 0
    %340 = vmatpush1.bf16.msra.mxu0 0
    %341 = vmatprep.mubr.bf16.mxu0 0
    %342 = vmatmul.mubr.bf16.gmra.mrb[0].mxu0 %v244
    %v343 = vpop.f32.mrb[0].mxu0
    %v344 = vadd.f32 0.0, %v343
    %v345 = vpop.f32.mrb[0].mxu0
    %v346 = vpop.f32.mrb[0].mxu0
    %v347 = vadd.f32 0.0, %v346
    %v348 = vpop.f32.mrb[0].mxu0
    %349 = vdwg.mxu0
    %v350 = vadd.f32 %v344, %v347
    %v351 = vrot.slane %v350, 4
    %v352 = vadd.f32 %v350, %v351
    %v353 = vrot.slane %v352, 2
    %v354 = vadd.f32 %v352, %v353
    %v355 = vrot.slane %v354, 1
    %v356 = vadd.f32 %v354, %v355
    %v357 = vmul.f32 %v356, 0.125
    %v358 = vmul.f32 %v344, %v344
    %v359 = vmul.f32 %v347, %v347
    %v360 = vadd.f32 %v358, %v359
    %v361 = vrot.slane %v360, 4
    %v362 = vadd.f32 %v360, %v361
    %v363 = vrot.slane %v362, 2
    %v364 = vadd.f32 %v362, %v363
    %v365 = vrot.slane %v364, 1
    %v366 = vadd.f32 %v364, %v365
    %v367 = vmul.f32 %v366, 0.125
    %v368 = vmul.f32 %v357, %v357
    %v369 = vsub.f32 %v367, %v368
    %v370 = vmax.f32 %v369, 0.0
    %v371 = vld [vmem:[%s5] sm:$0x1]
    %v372 = vadd.f32 %v370, 1e-05
    %v373 = vrsqrt.pop %v372
    %v374 = vmul.f32 %v371, %v373
    %v375 = vld [vmem:[%s6] sm:$0x1]
    %v376 = vmul.f32 %v357, %v374
    %v377 = vsub.f32 %v375, %v376
    %v379 = vlaneseq
    %v380 = vshrl.u32 %v379, 7
    %v381 = vsub.s32 0, %v380
    %v382 = vrot.slane %v374, %v381
    %v384 = vmul.f32 %v344, %v382
    %v385 = vmul.f32 %v347, %v382
    %v387 = vlaneseq
    %v388 = vshrl.u32 %v387, 7
    %v389 = vsub.s32 0, %v388
    %v390 = vrot.slane %v377, %v389
    %v392 = vadd.f32 %v384, %v390
    %v393 = vadd.f32 %v385, %v390
    %v394 = vmax.f32 %v392, 0.0
    %v395 = vmax.f32 %v393, 0.0
    %v396 = vpack.c.bf16 %v395, %v394
    %v397 = vld [vmem:[#allocation6] sm:$0xf]
    %v398 = vld [vmem:[#allocation6 + $0x4] sm:$0xf]
    %v399 = vld [vmem:[#allocation6 + $0x8] sm:$0xf]
    %v400 = vld [vmem:[#allocation6 + $0xc] sm:$0xf]
    %v401 = vld [vmem:[#allocation6 + $0x10] sm:$0xf]
    %v402 = vld [vmem:[#allocation6 + $0x14] sm:$0xf]
    %v403 = vld [vmem:[#allocation6 + $0x18] sm:$0xf]
    %v404 = vld [vmem:[#allocation6 + $0x1c] sm:$0xf]
    %v405 = vld [vmem:[#allocation6 + $0x20] sm:$0xf]
    %v406 = vld [vmem:[#allocation6 + $0x24] sm:$0xf]
    %v407 = vld [vmem:[#allocation6 + $0x28] sm:$0xf]
    %v408 = vld [vmem:[#allocation6 + $0x2c] sm:$0xf]
    %v409 = vld [vmem:[#allocation6 + $0x30] sm:$0xf]
    %v410 = vld [vmem:[#allocation6 + $0x34] sm:$0xf]
    %v411 = vld [vmem:[#allocation6 + $0x38] sm:$0xf]
    %v412 = vld [vmem:[#allocation6 + $0x3c] sm:$0xf]
    %v413 = vld [vmem:[%s8] sm:$0x1]
    %v415 = vlaneseq
    %v416 = vshrl.u32 %v415, 7
    %v417 = vsub.s32 0, %v416
    %v418 = vrot.slane %v413, %v417
    %v436 = vunpack.c.l.b16 %v397
    %v437 = vunpack.c.l.b16 %v398
    %v438 = vunpack.c.l.b16 %v399
    %v439 = vunpack.c.l.b16 %v400
    %v440 = vunpack.c.l.b16 %v401
    %v441 = vunpack.c.l.b16 %v402
    %v442 = vunpack.c.l.b16 %v403
    %v443 = vunpack.c.l.b16 %v404
    %v444 = vunpack.c.l.b16 %v405
    %v445 = vunpack.c.l.b16 %v406
    %v446 = vunpack.c.l.b16 %v407
    %v447 = vunpack.c.l.b16 %v408
    %v448 = vunpack.c.l.b16 %v409
    %v449 = vunpack.c.l.b16 %v410
    %v450 = vunpack.c.l.b16 %v411
    %v451 = vunpack.c.l.b16 %v412
    %v452 = vpack.c.b16 %v437, %v436
    %v453 = vpack.c.b16 %v439, %v438
    %v454 = vpack.c.b16 %v441, %v440
    %v455 = vpack.c.b16 %v443, %v442
    %v456 = vpack.c.b16 %v445, %v444
    %v457 = vpack.c.b16 %v447, %v446
    %v458 = vpack.c.b16 %v449, %v448
    %v459 = vpack.c.b16 %v451, %v450
    %468 = vmatprep.subr.bf16.mxu0 0
    %469 = vmatpush1.bf16.msra.mxu0 %v452
    %470 = vmatprep.subr.bf16.mxu0 0
    %471 = vmatpush1.bf16.msra.mxu0 %v453
    %472 = vmatprep.subr.bf16.mxu0 0
    %473 = vmatpush1.bf16.msra.mxu0 %v454
    %474 = vmatprep.subr.bf16.mxu0 0
    %475 = vmatpush1.bf16.msra.mxu0 %v455
    %476 = vmatprep.subr.bf16.mxu0 0
    %477 = vmatpush1.bf16.msra.mxu0 %v456
    %478 = vmatprep.subr.bf16.mxu0 0
    %479 = vmatpush1.bf16.msra.mxu0 %v457
    %480 = vmatprep.subr.bf16.mxu0 0
    %481 = vmatpush1.bf16.msra.mxu0 %v458
    %482 = vmatprep.subr.bf16.mxu0 0
    %483 = vmatpush1.bf16.msra.mxu0 %v459
    %484 = vmatprep.subr.bf16.mxu0 0
    %485 = vmatpush1.bf16.msra.mxu0 0
    %486 = vmatprep.subr.bf16.mxu0 0
    %487 = vmatpush1.bf16.msra.mxu0 0
    %488 = vmatprep.subr.bf16.mxu0 0
    %489 = vmatpush1.bf16.msra.mxu0 0
    %490 = vmatprep.subr.bf16.mxu0 0
    %491 = vmatpush1.bf16.msra.mxu0 0
    %492 = vmatprep.subr.bf16.mxu0 0
    %493 = vmatpush1.bf16.msra.mxu0 0
    %494 = vmatprep.subr.bf16.mxu0 0
    %495 = vmatpush1.bf16.msra.mxu0 0
    %496 = vmatprep.subr.bf16.mxu0 0
    %497 = vmatpush1.bf16.msra.mxu0 0
    %498 = vmatprep.subr.bf16.mxu0 0
    %499 = vmatpush1.bf16.msra.mxu0 0
    %500 = vmatprep.mubr.bf16.mxu0 0
    %501 = vmatmul.mubr.bf16.gmra.mrb[0].mxu0 %v396
    %v502 = vpop.f32.mrb[0].mxu0
    %v503 = vadd.f32 %v418, %v502
    %v504 = vpop.f32.mrb[0].mxu0
    %v505 = vpop.f32.mrb[0].mxu0
    %v506 = vadd.f32 %v418, %v505
    %v507 = vpop.f32.mrb[0].mxu0
    %508 = vdwg.mxu0
    %509 = vst [vmem:[%s9] sm:$0xff] %v503
    %510 = vst [vmem:[%s9 + $0x8] sm:$0xff] %v506
    // Predicated region
    $region50: #{_mlp_forward_impl.1} parent=1 // pred_check
      _
    $region51: #{_mlp_forward_impl.1} parent=1 // pred_check_branch
      %512 = sbr.rel (0) target = $region53
    $region52: #{_mlp_forward_impl.1} parent=1 // pred_region
      _
    $region53: #{_mlp_forward_impl.1} parent=1 // pred_fallthru
      _
    // Predicated region
    $region54: #{_mlp_forward_impl.1} parent=1 // pred_check
      _
    $region55: #{_mlp_forward_impl.1} parent=1 // pred_check_branch
      %514 = sbr.rel (0) target = $region57
    $region56: #{_mlp_forward_impl.1} parent=1 // pred_region
      _
    $region57: #{_mlp_forward_impl.1} parent=1 // pred_fallthru
      _
    %515 = vsyncpa [#allocation3], 1
    %516 = vsyncpa [#allocation5], 1

</llo_original>
